<compile_context>
chip_gen: v7x
topology: tpu7x:2x2x1
jax: 0.10.0
libtpu: 0.0.40
codegen_flags: <defaults>
</compile_context>

<pallas_src>
import jax
import jax.numpy as jnp
from jax.experimental import pallas as pl
from jax.experimental.pallas import tpu as pltpu

BN_EPS = 1e-5
LANE = 128


def net2_kernel(x_ref, w1_ref, bn_ref, w2_ref, b2_ref, out_ref):
    # fc1: (B, I) @ (I, H) -> (B, H). bf16 MXU inputs, f32 accumulation.
    # NOTE: fc1 bias is intentionally omitted -- training-mode BatchNorm
    # subtracts the per-feature batch mean, which removes it exactly.
    x_bf = x_ref[...].astype(jnp.bfloat16)
    h = jnp.dot(x_bf, w1_ref[...], preferred_element_type=jnp.float32)  # (B,H) f32

    # BatchNorm1d (training-mode forward, biased batch variance), folded into
    # a single per-feature scale/shift applied to h.
    mean = jnp.mean(h, axis=0, keepdims=True)                    # (1, H)
    centered = h - mean
    var = jnp.mean(centered * centered, axis=0, keepdims=True)   # (1, H)
    inv_std = jax.lax.rsqrt(var + BN_EPS)
    gamma = bn_ref[0:1, :]
    beta = bn_ref[1:2, :]
    s = inv_std * gamma                                          # (1, H)
    t = beta - mean * s                                          # (1, H)
    hn = h * s + t

    # ReLU, then second matmul in bf16 (f32 accumulation). W2 is pre-padded
    # to a lane-dense (H, 128); padded columns are zero.
    a = jnp.maximum(hn, 0.0).astype(jnp.bfloat16)
    y = jnp.dot(a, w2_ref[...], preferred_element_type=jnp.float32)
    y = y + b2_ref[...]

    out_ref[...] = y.astype(out_ref.dtype)


def prep_params(w1, b1, gamma, beta, w2, b2):
    """One-time parameter prep (hoisted out of the per-call path).

    - b1 is dropped (cancelled by training-mode BN mean subtraction).
    - Weights pre-transposed to row-major (K, N) and cast to bf16.
    - gamma/beta stacked into one (2, H) operand.
    - W2^T / b2 zero-padded to a lane-dense output width (multiple of 128).
    """
    del b1  # mathematically a no-op under training-mode BatchNorm
    w1 = jnp.asarray(w1, jnp.float32)
    w2 = jnp.asarray(w2, jnp.float32)
    C, H = w2.shape
    c_pad = ((C + LANE - 1) // LANE) * LANE

    w1_t = w1.T.astype(jnp.bfloat16)                                  # (I, H)
    bn = jnp.stack([jnp.asarray(gamma, jnp.float32),
                    jnp.asarray(beta, jnp.float32)], axis=0)          # (2, H)
    w2_t = jnp.zeros((H, c_pad), jnp.float32).at[:, :C].set(w2.T)
    w2_t = w2_t.astype(jnp.bfloat16)                                  # (H, c_pad)
    b2_pad = jnp.zeros((1, c_pad), jnp.float32).at[0, :C].set(
        jnp.asarray(b2, jnp.float32))                                 # (1, c_pad)

    return dict(w1_t=w1_t, bn=bn, w2_t=w2_t, b2=b2_pad, num_classes=C)


def net2_forward(x, p):
    """x: (B, input_size); p: output of prep_params. Returns (B, num_classes)."""
    B = x.shape[0]
    c_pad = p["w2_t"].shape[-1]
    y_pad = pl.pallas_call(
        net2_kernel,
        out_shape=jax.ShapeDtypeStruct((B, c_pad), x.dtype),
        # Tiny problem: no grid, every operand is loaded whole into VMEM.
        in_specs=[
            pl.BlockSpec(memory_space=pltpu.VMEM),  # x
            pl.BlockSpec(memory_space=pltpu.VMEM),  # W1^T (bf16)
            pl.BlockSpec(memory_space=pltpu.VMEM),  # [gamma; beta] (2, H)
            pl.BlockSpec(memory_space=pltpu.VMEM),  # W2^T padded (bf16)
            pl.BlockSpec(memory_space=pltpu.VMEM),  # b2 padded
        ],
        out_specs=pl.BlockSpec(memory_space=pltpu.VMEM),
    )(x, p["w1_t"], p["bn"], p["w2_t"], p["b2"])
    return y_pad[:, :p["num_classes"]]


def net2_ref(x, w1, b1, gamma, beta, w2, b2):
    """Pure-f32 JAX reference mirroring the PyTorch training-mode forward."""
    h = x @ w1.T + b1
    mean = jnp.mean(h, axis=0, keepdims=True)
    var = jnp.mean((h - mean) ** 2, axis=0, keepdims=True)  # biased, as in BN fwd
    hn = (h - mean) / jnp.sqrt(var + BN_EPS) * gamma + beta
    a = jnp.maximum(hn, 0.0)
    return a @ w2.T + b2


def net2_ref_kernel_math(x, w1, gamma, beta, w2, b2):
    """Reference using exactly the kernel's math (bf16 matmul operands, f32
    accumulation, folded BN, no fc1 bias) for a tight numerical check."""
    h = jnp.dot(x.astype(jnp.bfloat16), w1.T.astype(jnp.bfloat16),
                preferred_element_type=jnp.float32)
    mean = jnp.mean(h, axis=0, keepdims=True)
    centered = h - mean
    var = jnp.mean(centered * centered, axis=0, keepdims=True)
    inv_std = jax.lax.rsqrt(var + BN_EPS)
    s = inv_std * gamma.reshape(1, -1)
    t = beta.reshape(1, -1) - mean * s
    a = jnp.maximum(h * s + t, 0.0).astype(jnp.bfloat16)
    y = jnp.dot(a, w2.T.astype(jnp.bfloat16), preferred_element_type=jnp.float32)
    return y + b2.reshape(1, -1)


if __name__ == "__main__":
    B = 8
    input_size = 64
    hidden_size = 128   # lane-dense intermediate (full 128-lane vreg width)
    num_classes = 10

    key = jax.random.PRNGKey(0)
    k_x, k_w1, k_b1, k_g, k_bt, k_w2, k_b2 = jax.random.split(key, 7)

    # Deterministic init (uniform, PyTorch-Linear-like fan-in scaling).
    s1 = 1.0 / (input_size ** 0.5)
    s2 = 1.0 / (hidden_size ** 0.5)
    w1 = jax.random.uniform(k_w1, (hidden_size, input_size), jnp.float32, -s1, s1)
    b1 = jax.random.uniform(k_b1, (hidden_size,), jnp.float32, -s1, s1)
    gamma = 1.0 + 0.1 * jax.random.normal(k_g, (hidden_size,), jnp.float32)
    beta = 0.1 * jax.random.normal(k_bt, (hidden_size,), jnp.float32)
    w2 = jax.random.uniform(k_w2, (num_classes, hidden_size), jnp.float32, -s2, s2)
    b2 = jax.random.uniform(k_b2, (num_classes,), jnp.float32, -s2, s2)

    x = jax.random.normal(k_x, (B, input_size), jnp.float32)

    # One-time param prep (transposes / padding / dtype casts hoisted out of
    # the per-call path).
    params = prep_params(w1, b1, gamma, beta, w2, b2)

    y = net2_forward(x, params)
    jax.block_until_ready(y)
    assert y.shape == (B, num_classes)

    # Tight check against a reference that mirrors the kernel math exactly.
    y_mirror = net2_ref_kernel_math(x, w1, gamma, beta, w2, b2)
    assert jnp.allclose(y, y_mirror, atol=1e-3, rtol=1e-3)

    # Looser check against the pure-f32 PyTorch-style forward; the gap is the
    # bf16 rounding of the matmul operands (typically ~3e-3 here).
    y_f32 = net2_ref(x, w1, b1, gamma, beta, w2, b2)
    assert jnp.allclose(y, y_f32, atol=3e-2, rtol=3e-2)

    # TODO(synk): BatchNorm1d running_mean/running_var buffer updates are
    # training-time state mutation with no effect on the forward output, so
    # they are not reproduced here. This kernel hard-codes training-mode BN
    # (batch statistics); eval-mode (running stats) would need gamma/beta/mean
    # /var folded differently and would make the dropped fc1 bias relevant.

    print("KERNEL_OK")
</pallas_src>

<mosaic_0001>
module attributes {stable_mosaic.version = 11 : i64} {
  func.func @net2_kernel(%arg0: memref<8x64xf32, #tpu.memory_space<vmem>>, %arg1: memref<64x128xbf16, #tpu.memory_space<vmem>>, %arg2: memref<2x128xf32, #tpu.memory_space<vmem>>, %arg3: memref<128x128xbf16, #tpu.memory_space<vmem>>, %arg4: memref<1x128xf32, #tpu.memory_space<vmem>>, %arg5: memref<8x128xf32, #tpu.memory_space<vmem>>) attributes {dimension_semantics = [], scalar_prefetch = 0 : i64, scratch_operands = 0 : i64, tpu.core_type = #tpu.core_type<tc>} {
    %c0 = arith.constant 0 : index
    %c0_0 = arith.constant 0 : index
    %0 = vector.load %arg0[%c0, %c0_0] : memref<8x64xf32, #tpu.memory_space<vmem>>, vector<8x64xf32>
    %1 = arith.truncf %0 : vector<8x64xf32> to vector<8x64xbf16>
    %c0_1 = arith.constant 0 : index
    %c0_2 = arith.constant 0 : index
    %2 = vector.load %arg1[%c0_1, %c0_2] : memref<64x128xbf16, #tpu.memory_space<vmem>>, vector<64x128xbf16>
    %cst = arith.constant dense<0.000000e+00> : vector<8x128xf32>
    %3 = tpu.matmul %1, %2, %cst {dimension_numbers = #tpu.dot_dimension_numbers<[1], [0], [0], [1], [0, 0, 1, 1], [], []>} : vector<8x64xbf16>, vector<64x128xbf16>, vector<8x128xf32> -> vector<8x128xf32>
    %cst_3 = arith.constant dense<0.000000e+00> : vector<128xf32>
    %4 = vector.multi_reduction <add>, %3, %cst_3 [0] : vector<8x128xf32> to vector<128xf32>
    %5 = vector.shape_cast %4 : vector<128xf32> to vector<1x128xf32>
    %cst_4 = arith.constant 8.000000e+00 : f32
    %6 = vector.broadcast %cst_4 : f32 to vector<1x128xf32>
    %7 = arith.divf %5, %6 : vector<1x128xf32>
    %8 = vector.broadcast %7 : vector<1x128xf32> to vector<8x128xf32>
    %9 = arith.subf %3, %8 : vector<8x128xf32>
    %10 = arith.mulf %9, %9 : vector<8x128xf32>
    %cst_5 = arith.constant dense<0.000000e+00> : vector<128xf32>
    %11 = vector.multi_reduction <add>, %10, %cst_5 [0] : vector<8x128xf32> to vector<128xf32>
    %12 = vector.shape_cast %11 : vector<128xf32> to vector<1x128xf32>
    %cst_6 = arith.constant 8.000000e+00 : f32
    %13 = vector.broadcast %cst_6 : f32 to vector<1x128xf32>
    %14 = arith.divf %12, %13 : vector<1x128xf32>
    %cst_7 = arith.constant 9.99999974E-6 : f32
    %15 = vector.broadcast %cst_7 : f32 to vector<1x128xf32>
    %16 = arith.addf %14, %15 : vector<1x128xf32>
    %17 = math.rsqrt %16 : vector<1x128xf32>
    %c0_8 = arith.constant 0 : index
    %c0_9 = arith.constant 0 : index
    %18 = vector.load %arg2[%c0_8, %c0_9] : memref<2x128xf32, #tpu.memory_space<vmem>>, vector<1x128xf32>
    %c1 = arith.constant 1 : index
    %c0_10 = arith.constant 0 : index
    %19 = vector.load %arg2[%c1, %c0_10] : memref<2x128xf32, #tpu.memory_space<vmem>>, vector<1x128xf32>
    %20 = arith.mulf %17, %18 : vector<1x128xf32>
    %21 = arith.mulf %7, %20 : vector<1x128xf32>
    %22 = arith.subf %19, %21 : vector<1x128xf32>
    %23 = vector.broadcast %20 : vector<1x128xf32> to vector<8x128xf32>
    %24 = arith.mulf %3, %23 : vector<8x128xf32>
    %25 = vector.broadcast %22 : vector<1x128xf32> to vector<8x128xf32>
    %26 = arith.addf %24, %25 : vector<8x128xf32>
    %cst_11 = arith.constant 0.000000e+00 : f32
    %27 = vector.broadcast %cst_11 : f32 to vector<8x128xf32>
    %28 = arith.maximumf %26, %27 : vector<8x128xf32>
    %29 = arith.truncf %28 : vector<8x128xf32> to vector<8x128xbf16>
    %c0_12 = arith.constant 0 : index
    %c0_13 = arith.constant 0 : index
    %30 = vector.load %arg3[%c0_12, %c0_13] : memref<128x128xbf16, #tpu.memory_space<vmem>>, vector<128x128xbf16>
    %cst_14 = arith.constant dense<0.000000e+00> : vector<8x128xf32>
    %31 = tpu.matmul %29, %30, %cst_14 {dimension_numbers = #tpu.dot_dimension_numbers<[1], [0], [0], [1], [0, 0, 1, 1], [], []>} : vector<8x128xbf16>, vector<128x128xbf16>, vector<8x128xf32> -> vector<8x128xf32>
    %c0_15 = arith.constant 0 : index
    %c0_16 = arith.constant 0 : index
    %32 = vector.load %arg4[%c0_15, %c0_16] : memref<1x128xf32, #tpu.memory_space<vmem>>, vector<1x128xf32>
    %33 = vector.broadcast %32 : vector<1x128xf32> to vector<8x128xf32>
    %34 = arith.addf %31, %33 : vector<8x128xf32>
    %c0_17 = arith.constant 0 : index
    %c0_18 = arith.constant 0 : index
    %35 = vector.load %arg5[%c0_17, %c0_18] : memref<8x128xf32, #tpu.memory_space<vmem>>, vector<8x128xf32>
    tpu.vector_store %arg5[%c0_17, %c0_18], %34 {strides = array<i32>} : memref<8x128xf32, #tpu.memory_space<vmem>>, vector<8x128xf32>,
    return
  }
}

</mosaic_0001>

<llo_original>
// kernel: tpu_custom_call.1
$region0: #{tpu_custom_call.1}
  #allocation0 [shape = 'u32[]', space=smem, size = 0x4, offset = 0x4, fixed_abs, tag = 'smem constant byte address 0x4 - core index']
  #allocation1 [shape = 'u32[144,128]{1,0:T(1,128)}', space=vmem, size = 0x12000, scoped, tag = 'internal scratch']
  %s0 = inlined_call_operand.hbm [shape: f32[8,64], index: 0, kind: input, shape index: {}]
  %s1 = inlined_call_operand.hbm [shape: bf16[64,128], index: 1, kind: input, shape index: {}]
  %s2 = inlined_call_operand.vmem [shape: f32[2,128], index: 2, kind: input, shape index: {}]
  %s3 = inlined_call_operand.hbm [shape: bf16[128,128], index: 3, kind: input, shape index: {}]
  %s4 = inlined_call_operand.vmem [shape: f32[1,128], index: 4, kind: input, shape index: {}]
  %s5 = inlined_call_operand.hbm [shape: f32[8,128], index: 5, kind: output, shape index: {}]
  %s6 = sld [smem:[#allocation0]]
  $region42: #{tpu_custom_call.1} parent=0
    _
  %s8 = ssub.s32 1, %s6
  %s9 = scalar_select 0, %s8, %s6
  $region1: #{tpu_custom_call.1} parent=0
    #allocation2 [shape = 'u8[4096]{0}', space=vmem, size = 0x1000, scoped, tag = 'input window, operand 0, single buffered']
    #allocation3 [shape = 's32[1]{0}', space=sflag, size = 0x4, scoped, tag = 'scoped memory for tpu_custom_call.1']
    #allocation4 [shape = 's32[1]{0}', space=sflag, size = 0x4, scoped, tag = 'scoped memory for tpu_custom_call.1']
    #allocation5 [shape = 'u8[16384]{0}', space=vmem, size = 0x4000, scoped, tag = 'input window, operand 1, single buffered']
    #allocation6 [shape = 's32[1]{0}', space=sflag, size = 0x4, scoped, tag = 'scoped memory for tpu_custom_call.1']
    #allocation7 [shape = 'u8[32768]{0}', space=vmem, size = 0x8000, scoped, tag = 'input window, operand 3, single buffered']
    #allocation8 [shape = 'u8[4096]{0}', space=vmem, size = 0x1000, scoped, tag = 'output window, operand 0, single buffered']
    %10 = vsyncpa [#allocation3], 0
    %11 = vsyncpa [#allocation6], 0
    %12 = vsyncpa [#allocation4], 0
    // Predicated region
    $region2: #{tpu_custom_call.1} parent=1 // pred_check
      _
    $region3: #{tpu_custom_call.1} parent=1 // pred_check_branch
      %14 = sbr.rel (0) target = $region5
    $region4: #{tpu_custom_call.1} parent=1 // pred_region
      %s16 = ssub.s32 128, 128
      %17 = vsyncadd [#allocation3], %s16
      %s19 = sshll.u32 [#allocation2], 4
      %s20 = int_to_ptr.vmem [resolvable:$true] %s19
      %22 = dma.hbm_to_vmem [thread:$0]  %s0, 128, %s20, [#allocation3]
    $region5: #{tpu_custom_call.1} parent=1 // pred_fallthru
      _
    // Predicated region
    $region6: #{tpu_custom_call.1} parent=1 // pred_check
      _
    $region7: #{tpu_custom_call.1} parent=1 // pred_check_branch
      %24 = sbr.rel (0) target = $region9
    $region8: #{tpu_custom_call.1} parent=1 // pred_region
      %s26 = ssub.s32 512, 512
      %27 = vsyncadd [#allocation6], %s26
      %s28 = sshll.u32 [#allocation5], 4
      %s29 = int_to_ptr.vmem [resolvable:$true] %s28
      %34 = dma.hbm_to_vmem [thread:$0]  %s1, 512, %s29, [#allocation6], 64, 64, 4
    $region9: #{tpu_custom_call.1} parent=1 // pred_fallthru
      _
    // Predicated region
    $region10: #{tpu_custom_call.1} parent=1 // pred_check
      _
    $region11: #{tpu_custom_call.1} parent=1 // pred_check_branch
      %36 = sbr.rel (0) target = $region13
    $region12: #{tpu_custom_call.1} parent=1 // pred_region
      _
    $region13: #{tpu_custom_call.1} parent=1 // pred_fallthru
      _
    // Predicated region
    $region14: #{tpu_custom_call.1} parent=1 // pred_check
      _
    $region15: #{tpu_custom_call.1} parent=1 // pred_check_branch
      %38 = sbr.rel (0) target = $region17
    $region16: #{tpu_custom_call.1} parent=1 // pred_region
      %s40 = ssub.s32 1024, 1024
      %41 = vsyncadd [#allocation6], %s40
      %s42 = sshll.u32 [#allocation7], 4
      %s43 = int_to_ptr.vmem [resolvable:$true] %s42
      %48 = dma.hbm_to_vmem [thread:$0]  %s3, 1024, %s43, [#allocation6], 64, 64, 4
    $region17: #{tpu_custom_call.1} parent=1 // pred_fallthru
      _
    // Predicated region
    $region18: #{tpu_custom_call.1} parent=1 // pred_check
      _
    $region19: #{tpu_custom_call.1} parent=1 // pred_check_branch
      %50 = sbr.rel (0) target = $region21
    $region20: #{tpu_custom_call.1} parent=1 // pred_region
      _
    $region21: #{tpu_custom_call.1} parent=1 // pred_fallthru
      _
    // Predicated region
    $region22: #{tpu_custom_call.1} parent=1 // pred_check
      _
    $region23: #{tpu_custom_call.1} parent=1 // pred_check_branch
      %52 = sbr.rel (0) target = $region25
    $region24: #{tpu_custom_call.1} parent=1 // pred_region
      %53 = dma.done [#allocation3], 128
    $region25: #{tpu_custom_call.1} parent=1 // pred_fallthru
      _
    // Predicated region
    $region26: #{tpu_custom_call.1} parent=1 // pred_check
      _
    $region27: #{tpu_custom_call.1} parent=1 // pred_check_branch
      %55 = sbr.rel (0) target = $region29
    $region28: #{tpu_custom_call.1} parent=1 // pred_region
      %56 = dma.done [#allocation6], 512
    $region29: #{tpu_custom_call.1} parent=1 // pred_fallthru
      _
    // Predicated region
    $region30: #{tpu_custom_call.1} parent=1 // pred_check
      _
    $region31: #{tpu_custom_call.1} parent=1 // pred_check_branch
      %58 = sbr.rel (0) target = $region33
    $region32: #{tpu_custom_call.1} parent=1 // pred_region
      %59 = dma.done [#allocation6], 1024
    $region33: #{tpu_custom_call.1} parent=1 // pred_fallthru
      _
    %v61 = vld [vmem:[#allocation2] sm:$0xff]
    %v62 = vpack.c.bf16 %v61, %v61
    %v63 = vld [vmem:[#allocation5] sm:$0xf]
    %v64 = vld [vmem:[#allocation5 + $0x4] sm:$0xf]
    %v65 = vld [vmem:[#allocation5 + $0x8] sm:$0xf]
    %v66 = vld [vmem:[#allocation5 + $0xc] sm:$0xf]
    %v67 = vld [vmem:[#allocation5 + $0x10] sm:$0xf]
    %v68 = vld [vmem:[#allocation5 + $0x14] sm:$0xf]
    %v69 = vld [vmem:[#allocation5 + $0x18] sm:$0xf]
    %v70 = vld [vmem:[#allocation5 + $0x1c] sm:$0xf]
    %v79 = vunpack.c.l.b16 %v63
    %v80 = vunpack.c.l.b16 %v64
    %v81 = vunpack.c.l.b16 %v65
    %v82 = vunpack.c.l.b16 %v66
    %v83 = vunpack.c.l.b16 %v67
    %v84 = vunpack.c.l.b16 %v68
    %v85 = vunpack.c.l.b16 %v69
    %v86 = vunpack.c.l.b16 %v70
    %v87 = vpack.c.b16 %v80, %v79
    %v88 = vpack.c.b16 %v82, %v81
    %v89 = vpack.c.b16 %v84, %v83
    %v90 = vpack.c.b16 %v86, %v85
    %vm95 = vcmask 523264
    %v97 = vsel %vm95, %v62, 0
    %99 = vmatprep.subr.bf16.mxu0 0
    %100 = vmatpush1.bf16.msra.mxu0 %v87
    %101 = vmatprep.subr.bf16.mxu0 0
    %102 = vmatpush1.bf16.msra.mxu0 %v88
    %103 = vmatprep.subr.bf16.mxu0 0
    %104 = vmatpush1.bf16.msra.mxu0 %v89
    %105 = vmatprep.subr.bf16.mxu0 0
    %106 = vmatpush1.bf16.msra.mxu0 %v90
    %107 = vmatprep.subr.bf16.mxu0 0
    %108 = vmatpush1.bf16.msra.mxu0 0
    %109 = vmatprep.subr.bf16.mxu0 0
    %110 = vmatpush1.bf16.msra.mxu0 0
    %111 = vmatprep.subr.bf16.mxu0 0
    %112 = vmatpush1.bf16.msra.mxu0 0
    %113 = vmatprep.subr.bf16.mxu0 0
    %114 = vmatpush1.bf16.msra.mxu0 0
    %115 = vmatprep.subr.bf16.mxu0 0
    %116 = vmatpush1.bf16.msra.mxu0 0
    %117 = vmatprep.subr.bf16.mxu0 0
    %118 = vmatpush1.bf16.msra.mxu0 0
    %119 = vmatprep.subr.bf16.mxu0 0
    %120 = vmatpush1.bf16.msra.mxu0 0
    %121 = vmatprep.subr.bf16.mxu0 0
    %122 = vmatpush1.bf16.msra.mxu0 0
    %123 = vmatprep.subr.bf16.mxu0 0
    %124 = vmatpush1.bf16.msra.mxu0 0
    %125 = vmatprep.subr.bf16.mxu0 0
    %126 = vmatpush1.bf16.msra.mxu0 0
    %127 = vmatprep.subr.bf16.mxu0 0
    %128 = vmatpush1.bf16.msra.mxu0 0
    %129 = vmatprep.subr.bf16.mxu0 0
    %130 = vmatpush1.bf16.msra.mxu0 0
    %131 = vmatprep.mubr.bf16.mxu0 0
    %132 = vmatmul.mubr.bf16.gmra.mrb[0].mxu0 %v97
    %v133 = vpop.f32.mrb[0].mxu0
    %v134 = vadd.f32 0.0, %v133
    %v135 = vpop.f32.mrb[0].mxu0
    %v136 = vpop.f32.mrb[0].mxu0
    %v137 = vpop.f32.mrb[0].mxu0
    %138 = vdwg.mxu0
    %v139 = vrot.slane %v134, 4
    %v140 = vadd.f32 %v134, %v139
    %v141 = vrot.slane %v140, 2
    %v142 = vadd.f32 %v140, %v141
    %v143 = vrot.slane %v142, 1
    %v144 = vadd.f32 %v142, %v143
    %v145 = vrcp.pop 8.0
    %v146 = vmul.f32 %v144, %v145
    %v147 = vsub.f32 %v134, %v146
    %v148 = vmul.f32 %v147, %v147
    %v149 = vrot.slane %v148, 4
    %v150 = vadd.f32 %v148, %v149
    %v151 = vrot.slane %v150, 2
    %v152 = vadd.f32 %v150, %v151
    %v153 = vrot.slane %v152, 1
    %v154 = vadd.f32 %v152, %v153
    %v155 = vmul.f32 %v154, %v145
    %v156 = vadd.f32 %v155, 1e-05
    %v157 = vrsqrt.pop %v156
    %v158 = vld [vmem:[%s2] sm:$0x1]
    %v159 = vld [vmem:[%s2 + $0x1] sm:$0x1]
    %v160 = vmul.f32 %v157, %v158
    %v161 = vmul.f32 %v146, %v160
    %v162 = vsub.f32 %v159, %v161
    %v163 = vlaneseq
    %v164 = vshrl.u32 %v163, 7
    %v165 = vsub.s32 0, %v164
    %v166 = vrot.slane %v160, %v165
    %v167 = vmul.f32 %v134, %v166
    %v168 = vlaneseq
    %v169 = vshrl.u32 %v168, 7
    %v170 = vsub.s32 0, %v169
    %v171 = vrot.slane %v162, %v170
    %v172 = vadd.f32 %v167, %v171
    %v173 = vmax.f32 %v172, 0.0
    %v174 = vpack.c.bf16 %v173, %v173
    %v175 = vld [vmem:[#allocation7] sm:$0xf]
    %v176 = vld [vmem:[#allocation7 + $0x4] sm:$0xf]
    %v177 = vld [vmem:[#allocation7 + $0x8] sm:$0xf]
    %v178 = vld [vmem:[#allocation7 + $0xc] sm:$0xf]
    %v179 = vld [vmem:[#allocation7 + $0x10] sm:$0xf]
    %v180 = vld [vmem:[#allocation7 + $0x14] sm:$0xf]
    %v181 = vld [vmem:[#allocation7 + $0x18] sm:$0xf]
    %v182 = vld [vmem:[#allocation7 + $0x1c] sm:$0xf]
    %v183 = vld [vmem:[#allocation7 + $0x20] sm:$0xf]
    %v184 = vld [vmem:[#allocation7 + $0x24] sm:$0xf]
    %v185 = vld [vmem:[#allocation7 + $0x28] sm:$0xf]
    %v186 = vld [vmem:[#allocation7 + $0x2c] sm:$0xf]
    %v187 = vld [vmem:[#allocation7 + $0x30] sm:$0xf]
    %v188 = vld [vmem:[#allocation7 + $0x34] sm:$0xf]
    %v189 = vld [vmem:[#allocation7 + $0x38] sm:$0xf]
    %v190 = vld [vmem:[#allocation7 + $0x3c] sm:$0xf]
    %v191 = vld [vmem:[%s4] sm:$0x1]
    %v193 = vlaneseq
    %v194 = vshrl.u32 %v193, 7
    %v195 = vsub.s32 0, %v194
    %v196 = vrot.slane %v191, %v195
    %v214 = vunpack.c.l.b16 %v175
    %v215 = vunpack.c.l.b16 %v176
    %v216 = vunpack.c.l.b16 %v177
    %v217 = vunpack.c.l.b16 %v178
    %v218 = vunpack.c.l.b16 %v179
    %v219 = vunpack.c.l.b16 %v180
    %v220 = vunpack.c.l.b16 %v181
    %v221 = vunpack.c.l.b16 %v182
    %v222 = vunpack.c.l.b16 %v183
    %v223 = vunpack.c.l.b16 %v184
    %v224 = vunpack.c.l.b16 %v185
    %v225 = vunpack.c.l.b16 %v186
    %v226 = vunpack.c.l.b16 %v187
    %v227 = vunpack.c.l.b16 %v188
    %v228 = vunpack.c.l.b16 %v189
    %v229 = vunpack.c.l.b16 %v190
    %v230 = vpack.c.b16 %v215, %v214
    %v231 = vpack.c.b16 %v217, %v216
    %v232 = vpack.c.b16 %v219, %v218
    %v233 = vpack.c.b16 %v221, %v220
    %v234 = vpack.c.b16 %v223, %v222
    %v235 = vpack.c.b16 %v225, %v224
    %v236 = vpack.c.b16 %v227, %v226
    %v237 = vpack.c.b16 %v229, %v228
    %246 = vmatprep.subr.bf16.mxu0 0
    %247 = vmatpush1.bf16.msra.mxu0 %v230
    %248 = vmatprep.subr.bf16.mxu0 0
    %249 = vmatpush1.bf16.msra.mxu0 %v231
    %250 = vmatprep.subr.bf16.mxu0 0
    %251 = vmatpush1.bf16.msra.mxu0 %v232
    %252 = vmatprep.subr.bf16.mxu0 0
    %253 = vmatpush1.bf16.msra.mxu0 %v233
    %254 = vmatprep.subr.bf16.mxu0 0
    %255 = vmatpush1.bf16.msra.mxu0 %v234
    %256 = vmatprep.subr.bf16.mxu0 0
    %257 = vmatpush1.bf16.msra.mxu0 %v235
    %258 = vmatprep.subr.bf16.mxu0 0
    %259 = vmatpush1.bf16.msra.mxu0 %v236
    %260 = vmatprep.subr.bf16.mxu0 0
    %261 = vmatpush1.bf16.msra.mxu0 %v237
    %262 = vmatprep.subr.bf16.mxu0 0
    %263 = vmatpush1.bf16.msra.mxu0 0
    %264 = vmatprep.subr.bf16.mxu0 0
    %265 = vmatpush1.bf16.msra.mxu0 0
    %266 = vmatprep.subr.bf16.mxu0 0
    %267 = vmatpush1.bf16.msra.mxu0 0
    %268 = vmatprep.subr.bf16.mxu0 0
    %269 = vmatpush1.bf16.msra.mxu0 0
    %270 = vmatprep.subr.bf16.mxu0 0
    %271 = vmatpush1.bf16.msra.mxu0 0
    %272 = vmatprep.subr.bf16.mxu0 0
    %273 = vmatpush1.bf16.msra.mxu0 0
    %274 = vmatprep.subr.bf16.mxu0 0
    %275 = vmatpush1.bf16.msra.mxu0 0
    %276 = vmatprep.subr.bf16.mxu0 0
    %277 = vmatpush1.bf16.msra.mxu0 0
    %278 = vmatprep.mubr.bf16.mxu0 0
    %279 = vmatmul.mubr.bf16.gmra.mrb[0].mxu0 %v174
    %v280 = vpop.f32.mrb[0].mxu0
    %v281 = vadd.f32 %v196, %v280
    %v282 = vpop.f32.mrb[0].mxu0
    %v283 = vpop.f32.mrb[0].mxu0
    %v284 = vpop.f32.mrb[0].mxu0
    %285 = vdwg.mxu0
    %286 = vst [vmem:[#allocation8] sm:$0xff] %v281
    // Predicated region
    $region34: #{tpu_custom_call.1} parent=1 // pred_check
      _
    $region35: #{tpu_custom_call.1} parent=1 // pred_check_branch
      %288 = sbr.rel (0) target = $region37
    $region36: #{tpu_custom_call.1} parent=1 // pred_region
      %s290 = ssub.s32 128, 128
      %291 = vsyncadd [#allocation4], %s290
      %s293 = sshll.u32 [#allocation8], 4
      %s294 = int_to_ptr.vmem [resolvable:$true] %s293
      %296 = dma.vmem_to_hbm [thread:$0]  %s294, 128, %s5, [#allocation4]
    $region37: #{tpu_custom_call.1} parent=1 // pred_fallthru
      _
    // Predicated region
    $region38: #{tpu_custom_call.1} parent=1 // pred_check
      _
    $region39: #{tpu_custom_call.1} parent=1 // pred_check_branch
      %298 = sbr.rel (0) target = $region41
    $region40: #{tpu_custom_call.1} parent=1 // pred_region
      %299 = dma.done [#allocation4], 128
    $region41: #{tpu_custom_call.1} parent=1 // pred_fallthru
      _
    %300 = vsyncpa [#allocation3], 1
    %301 = vsyncpa [#allocation6], 1
    %302 = vsyncpa [#allocation4], 1

</llo_original>
